<compile_context>
chip_gen: v6e
topology: v6e:2x2x1
jax: 0.10.0
libtpu: 0.0.40
codegen_flags: <defaults>
</compile_context>

<pallas_src>
import math

import jax
import jax.numpy as jnp
import numpy as np
from jax import lax
from jax.experimental import pallas as pl
from jax.experimental.pallas import tpu as pltpu

IN_C = 64                            # in_c
OUT_C = 128                          # out_c (lane-dense: one 128-lane tile)
C_PAD = 128                          # layer-0 input channels zero-padded to a full lane tile
SPATIAL = 16                         # spatial
N_LAYERS = int(math.log2(SPATIAL))   # num_pools = 4 convs: 16 -> 8 -> 4 -> 2 -> 1
LEAKY_SLOPE = 0.01                   # nn.LeakyReLU() default
B_BLK = 4                            # batch elements per grid step (<=4 keeps v5e VMEM happy)


# ---------------------------------------------------------------------------
# Constant 0/1 "gather operators" for a 3x3 / stride-2 / pad-1 conv (per sample).
# S[k, m_out, m_in] picks input pixel (2*oy+ky-1, 2*ox+kx-1) for output pixel (oy, ox)
# and tap k = ky*3 + kx (zero row where the tap falls in the padding).
# ---------------------------------------------------------------------------
def _make_selection(h_in):
    h_out = h_in // 2
    s = np.zeros((9, h_out * h_out, h_in * h_in), np.float32)
    for ky in range(3):
        for kx in range(3):
            k = ky * 3 + kx
            for oy in range(h_out):
                iy = 2 * oy + ky - 1
                if iy < 0 or iy >= h_in:
                    continue
                for ox in range(h_out):
                    ix = 2 * ox + kx - 1
                    if ix < 0 or ix >= h_in:
                        continue
                    s[k, oy * h_out + ox, iy * h_in + ix] = 1.0
    return s


def _const_spec(shape):
    nd = len(shape)
    return pl.BlockSpec(tuple(shape), lambda i, _nd=nd: (0,) * _nd)


# ---------------------------------------------------------------------------
# Kernel 1: EqualLinear over the whole batch -- this is the module's return value.
# ---------------------------------------------------------------------------
def _equal_linear_kernel(x_ref, w_ref, b_ref, o_ref):
    o_ref[...] = (jnp.dot(x_ref[...], w_ref[...],
                          preferred_element_type=jnp.float32) + b_ref[...])


def _equal_linear(params, x):
    B = x.shape[0]
    Bp = -(-B // 8) * 8                                  # sublane-aligned batch
    xp = x.astype(jnp.float32)
    if Bp != B:
        xp = jnp.pad(xp, ((0, Bp - B), (0, 0)))
    out = pl.pallas_call(
        _equal_linear_kernel,
        grid=(1,),
        in_specs=[pl.BlockSpec((Bp, OUT_C), lambda i: (0, 0)),
                  pl.BlockSpec((OUT_C, OUT_C), lambda i: (0, 0)),
                  pl.BlockSpec((1, OUT_C), lambda i: (0, 0))],
        out_specs=pl.BlockSpec((Bp, OUT_C), lambda i: (0, 0)),
        out_shape=jax.ShapeDtypeStruct((Bp, OUT_C), jnp.float32),
    )(xp, params["lin_w"], params["lin_b"])
    return out[:B]


# ---------------------------------------------------------------------------
# Kernel 2: fused conv tower (4 x [3x3 s2 p1 conv + LeakyReLU]), B_BLK samples per step.
# Activations live as (B_BLK*H*W, 128) bf16 slabs with channels on the lane axis.
# ---------------------------------------------------------------------------
def _conv_tower_kernel(*refs):
    img_ref = refs[0]
    layer_refs = refs[1:1 + 3 * N_LAYERS]
    feats_ref = refs[1 + 3 * N_LAYERS]
    patch_ref = refs[2 + 3 * N_LAYERS]                    # (B_BLK*64, 9*128) bf16 scratch

    act = img_ref[0]                                      # (B_BLK*H*W, 128) bf16
    post = None
    for l in range(N_LAYERS):
        w_ref, b_ref, s_ref = layer_refs[3 * l:3 * l + 3]
        m_out = s_ref.shape[1]                            # B_BLK * out pixels (sublane padded)
        # im2col gather: 9 block-diagonal one-hot selection matmuls (exact), lane-concatenated
        # into the patch scratch.  No strided/offset sublane slices, no relayouts.
        for k in range(9):
            patch_ref[0:m_out, k * C_PAD:(k + 1) * C_PAD] = jnp.dot(
                s_ref[k], act, preferred_element_type=jnp.bfloat16)
        # ONE conv matmul per layer: (m_out, 9*128) @ (9*128, 128), f32 accumulation.
        pre = jnp.dot(patch_ref[0:m_out, :], w_ref[...],
                      preferred_element_type=jnp.float32) + b_ref[...]
        post = jnp.maximum(pre, LEAKY_SLOPE * pre)        # LeakyReLU(0.01), f32 epilogue
        act = post.astype(jnp.bfloat16)

    # Final spatial size is 1x1: row b of `post` is sample b's feature.
    # Rows >= B_BLK are last-layer sublane padding and are dropped here.
    feats_ref[0] = post[0:B_BLK, :]


def _conv_tower(params, img):
    B = img.shape[0]
    nb = pl.cdiv(B, B_BLK)
    Bp = nb * B_BLK
    # NCHW -> (B, H*W, C) once in XLA (outside the kernel); zero-pad channels 64->128; bf16.
    x = jnp.transpose(img, (0, 2, 3, 1)).reshape(B, SPATIAL * SPATIAL, IN_C)
    x = jnp.pad(x, ((0, Bp - B), (0, 0), (0, C_PAD - IN_C))).astype(jnp.bfloat16)
    x = x.reshape(nb, B_BLK * SPATIAL * SPATIAL, C_PAD)   # sample-major rows inside each block

    args = [x]
    in_specs = [pl.BlockSpec((1, B_BLK * SPATIAL * SPATIAL, C_PAD), lambda i: (i, 0, 0))]
    for l in range(N_LAYERS):
        for a in (params["conv_w"][l], params["conv_b"][l], params["sel"][l]):
            args.append(a)
            in_specs.append(_const_spec(a.shape))         # same block every step -> VMEM resident

    feats = pl.pallas_call(
        _conv_tower_kernel,
        grid=(nb,),
        in_specs=in_specs,
        out_specs=pl.BlockSpec((1, B_BLK, OUT_C), lambda i: (i, 0, 0)),
        out_shape=jax.ShapeDtypeStruct((nb, B_BLK, OUT_C), jnp.float32),
        scratch_shapes=[pltpu.VMEM((B_BLK * (SPATIAL // 2) ** 2, 9 * C_PAD), jnp.bfloat16)],
        compiler_params=pltpu.CompilerParams(
            dimension_semantics=("parallel",),            # batch blocks split across TCs
            vmem_limit_bytes=32 * 1024 * 1024),
    )(*args)
    return feats.reshape(Bp, OUT_C)[:B]


def gradual_style_block_forward(params, img, x, compute_feats=False):
    """Torch forward: returns EqualLinear(x).  The conv features are computed by the torch
    forward but never returned; set compute_feats=True to also materialize them (parity/debug)."""
    out = _equal_linear(params, x)
    if not compute_feats:
        return out
    feats = _conv_tower(params, img)
    return out, feats


# ---------------------------------------------------------------------------
# Deterministic synthetic parameters (shapes follow the torch __init__).
# ---------------------------------------------------------------------------
def init_params(key):
    ks = jax.random.split(key, 2 * N_LAYERS + 1)
    conv_w_im2col, conv_w_hwio, conv_b, sel = [], [], [], []
    cin = IN_C
    h = SPATIAL
    for l in range(N_LAYERS):
        # torch Conv2d weight (out,in,3,3) generated as (9, in, out), k = ky*3 + kx
        w = jax.random.normal(ks[2 * l], (9, cin, OUT_C), jnp.float32) * np.sqrt(2.0 / (9 * cin))
        b = jax.random.normal(ks[2 * l + 1], (1, OUT_C), jnp.float32) * 0.05
        conv_w_hwio.append(w.reshape(3, 3, cin, OUT_C).astype(jnp.bfloat16))   # reference
        w_pad = jnp.zeros((9, C_PAD, OUT_C), jnp.float32).at[:, :cin, :].set(w)
        conv_w_im2col.append(w_pad.reshape(9 * C_PAD, OUT_C).astype(jnp.bfloat16))
        conv_b.append(b)

        # block-diagonal (over the B_BLK batch block) one-hot tap selections, bf16
        s = _make_selection(h)                                        # (9, m_out, m_in)
        sb = np.stack([np.kron(np.eye(B_BLK, dtype=np.float32), s[k]) for k in range(9)])
        rows = sb.shape[1]
        rows_pad = max(8, -(-rows // 8) * 8)                          # sublane-align output rows
        if rows_pad != rows:
            sb = np.pad(sb, ((0, 0), (0, rows_pad - rows), (0, 0)))   # padded rows gather zeros
        sel.append(jnp.asarray(sb, jnp.bfloat16))

        cin = OUT_C
        h //= 2

    # EqualLinear(out_c, out_c, lr_mul=1, activation=None):
    #   out = x @ (weight * scale).T + bias,  weight ~ N(0,1)/lr_mul,  scale = lr_mul/sqrt(in)
    lr_mul = 1.0
    w_raw = jax.random.normal(ks[-1], (OUT_C, OUT_C), jnp.float32) / lr_mul
    scale = lr_mul / np.sqrt(OUT_C)
    lin_w = jnp.transpose(w_raw) * scale                  # stored (in, out), scale folded in
    lin_b = jnp.zeros((1, OUT_C), jnp.float32)
    return {"conv_w": conv_w_im2col, "conv_w_hwio": conv_w_hwio, "conv_b": conv_b,
            "sel": sel, "lin_w": lin_w, "lin_b": lin_b}


# ---------------------------------------------------------------------------
# Pure-JAX reference (same bf16-input / f32-accumulate precision as the kernel).
# ---------------------------------------------------------------------------
def reference_forward(params, img, x):
    h = jnp.transpose(img, (0, 2, 3, 1)).astype(jnp.float32)          # NHWC
    for l in range(N_LAYERS):
        h = lax.conv_general_dilated(
            h.astype(jnp.bfloat16), params["conv_w_hwio"][l],
            window_strides=(2, 2), padding=((1, 1), (1, 1)),
            dimension_numbers=("NHWC", "HWIO", "NHWC"),
            preferred_element_type=jnp.float32)
        h = h + params["conv_b"][l]
        h = jnp.maximum(h, LEAKY_SLOPE * h)
    feats = h.reshape(-1, OUT_C)                                       # img.view(-1, out_c)
    out = x.astype(jnp.float32) @ params["lin_w"] + params["lin_b"]
    return out, feats


if __name__ == "__main__":
    key = jax.random.PRNGKey(0)
    k_param, k_img, k_x = jax.random.split(key, 3)

    params = init_params(k_param)
    B = 8
    img = jax.random.normal(k_img, (B, IN_C, SPATIAL, SPATIAL), jnp.float32)
    x = jax.random.normal(k_x, (B, OUT_C), jnp.float32)

    fwd = jax.jit(gradual_style_block_forward, static_argnames=("compute_feats",))

    # 1) Torch-parity fast path (what the module's forward actually returns).
    out = fwd(params, img, x)
    jax.block_until_ready(out)

    # 2) Debug/parity path: also run the fused conv tower.
    out_dbg, feats = fwd(params, img, x, compute_feats=True)
    jax.block_until_ready((out_dbg, feats))

    # correctness check against the pure-JAX reference
    ref_out, ref_feats = reference_forward(params, img, x)
    assert out.shape == (B, OUT_C) and feats.shape == (B, OUT_C), (out.shape, feats.shape)
    np.testing.assert_allclose(np.asarray(out), np.asarray(ref_out), rtol=2e-2, atol=2e-2)
    np.testing.assert_allclose(np.asarray(out_dbg), np.asarray(ref_out), rtol=2e-2, atol=2e-2)
    np.testing.assert_allclose(np.asarray(feats), np.asarray(ref_feats), rtol=2e-2, atol=2e-2)
    assert bool(jnp.all(jnp.isfinite(out))) and bool(jnp.all(jnp.isfinite(feats)))
    print("KERNEL_OK")
</pallas_src>

<mosaic_0001>
module attributes {stable_mosaic.version = 11 : i64} {
  func.func @_equal_linear_kernel(%arg0: i32, %arg1: memref<8x128xf32, #tpu.memory_space<vmem>>, %arg2: memref<128x128xf32, #tpu.memory_space<vmem>>, %arg3: memref<1x128xf32, #tpu.memory_space<vmem>>, %arg4: memref<8x128xf32, #tpu.memory_space<vmem>>) attributes {dimension_semantics = [#tpu.dimension_semantics<arbitrary>], iteration_bounds = array<i64: 1>, scalar_prefetch = 0 : i64, scratch_operands = 0 : i64, tpu.core_type = #tpu.core_type<tc>, window_params = [{pipeline_mode = #tpu.pipeline_mode<synchronous>, transform_indices = @transform_0, window_bounds = array<i64: 8, 128>}, {pipeline_mode = #tpu.pipeline_mode<synchronous>, transform_indices = @transform_1, window_bounds = array<i64: 128, 128>}, {pipeline_mode = #tpu.pipeline_mode<synchronous>, transform_indices = @transform_2, window_bounds = array<i64: 1, 128>}, {pipeline_mode = #tpu.pipeline_mode<synchronous>, transform_indices = @transform_3, window_bounds = array<i64: 8, 128>}]} {
    %c0 = arith.constant 0 : index
    %c0_0 = arith.constant 0 : index
    %0 = vector.load %arg1[%c0, %c0_0] : memref<8x128xf32, #tpu.memory_space<vmem>>, vector<8x128xf32>
    %c0_1 = arith.constant 0 : index
    %c0_2 = arith.constant 0 : index
    %1 = vector.load %arg2[%c0_1, %c0_2] : memref<128x128xf32, #tpu.memory_space<vmem>>, vector<128x128xf32>
    %cst = arith.constant dense<0.000000e+00> : vector<8x128xf32>
    %2 = tpu.matmul %0, %1, %cst {dimension_numbers = #tpu.dot_dimension_numbers<[1], [0], [0], [1], [0, 0, 1, 1], [], []>} : vector<8x128xf32>, vector<128x128xf32>, vector<8x128xf32> -> vector<8x128xf32>
    %c0_3 = arith.constant 0 : index
    %c0_4 = arith.constant 0 : index
    %3 = vector.load %arg3[%c0_3, %c0_4] : memref<1x128xf32, #tpu.memory_space<vmem>>, vector<1x128xf32>
    %4 = vector.broadcast %3 : vector<1x128xf32> to vector<8x128xf32>
    %5 = arith.addf %2, %4 : vector<8x128xf32>
    %c0_5 = arith.constant 0 : index
    %c0_6 = arith.constant 0 : index
    %6 = vector.load %arg4[%c0_5, %c0_6] : memref<8x128xf32, #tpu.memory_space<vmem>>, vector<8x128xf32>
    tpu.vector_store %arg4[%c0_5, %c0_6], %5 {strides = array<i32>} : memref<8x128xf32, #tpu.memory_space<vmem>>, vector<8x128xf32>,
    return
  }
  func.func @transform_0(%arg0: i32) -> (i32, i32) {
    %c0_i32 = arith.constant 0 : i32
    %c0_i32_0 = arith.constant 0 : i32
    %c0_i32_1 = arith.constant 0 : i32
    return %c0_i32, %c0_i32_0 : i32, i32
  }
  func.func @transform_1(%arg0: i32) -> (i32, i32) {
    %c0_i32 = arith.constant 0 : i32
    %c0_i32_0 = arith.constant 0 : i32
    %c0_i32_1 = arith.constant 0 : i32
    return %c0_i32, %c0_i32_0 : i32, i32
  }
  func.func @transform_2(%arg0: i32) -> (i32, i32) {
    %c0_i32 = arith.constant 0 : i32
    %c0_i32_0 = arith.constant 0 : i32
    %c0_i32_1 = arith.constant 0 : i32
    return %c0_i32, %c0_i32_0 : i32, i32
  }
  func.func @transform_3(%arg0: i32) -> (i32, i32) {
    %c0_i32 = arith.constant 0 : i32
    %c0_i32_0 = arith.constant 0 : i32
    %c0_i32_1 = arith.constant 0 : i32
    return %c0_i32, %c0_i32_0 : i32, i32
  }
}

</mosaic_0001>

<llo_original>
// kernel: gradual_style_block_forward.1
$region0: #{gradual_style_block_forward.1}
  #allocation0 [shape = 'u32[]', space=smem, size = 0x4, offset = 0x4, fixed_abs, tag = 'smem constant byte address 0x4 - core index']
  #allocation1 [shape = 'u32[144,128]{1,0:T(1,128)}', space=vmem, size = 0x12000, scoped, tag = 'internal scratch']
  %s0 = inlined_call_operand.hbm [shape: f32[8,128], index: 0, kind: input, shape index: {}]
  %s1 = inlined_call_operand.hbm [shape: f32[128,128], index: 1, kind: input, shape index: {}]
  %s2 = inlined_call_operand.hbm [shape: f32[1,128], index: 2, kind: input, shape index: {}]
  %s3 = inlined_call_operand.hbm [shape: f32[8,128], index: 3, kind: output, shape index: {}]
  %s4 = sld [smem:[#allocation0]]
  $region34: #{gradual_style_block_forward.1} parent=0
    _
  %s6 = ssub.s32 1, %s4
  %s7 = scalar_select 0, %s6, %s4
  $region1: #{gradual_style_block_forward.1} parent=0
    #allocation2 [shape = 'u8[4096]{0}', space=vmem, size = 0x1000, scoped, tag = 'input window, operand 0, single buffered']
    #allocation3 [shape = 's32[1]{0}', space=sflag, size = 0x4, scoped, tag = 'scoped memory for gradual_style_block_forward.1']
    #allocation4 [shape = 's32[1]{0}', space=sflag, size = 0x4, scoped, tag = 'scoped memory for gradual_style_block_forward.1']
    #allocation5 [shape = 'u8[65536]{0}', space=vmem, size = 0x10000, scoped, tag = 'input window, operand 1, single buffered']
    #allocation6 [shape = 's32[1]{0}', space=sflag, size = 0x4, scoped, tag = 'scoped memory for gradual_style_block_forward.1']
    #allocation7 [shape = 'u8[512]{0}', space=vmem, size = 0x400, scoped, tag = 'input window, operand 2, single buffered']
    #allocation8 [shape = 'u8[4096]{0}', space=vmem, size = 0x1000, scoped, tag = 'output window, operand 0, single buffered']
    %8 = vsyncpa [#allocation3], 0
    %9 = vsyncpa [#allocation6], 0
    %10 = vsyncpa [#allocation4], 0
    // Predicated region
    $region2: #{gradual_style_block_forward.1} parent=1 // pred_check
      _
    $region3: #{gradual_style_block_forward.1} parent=1 // pred_check_branch
      %12 = sbr.rel (0) target = $region5
    $region4: #{gradual_style_block_forward.1} parent=1 // pred_region
      %s14 = ssub.s32 128, 128
      %15 = vsyncadd [#allocation3], %s14
      %s17 = sshll.u32 [#allocation2], 4
      %s18 = int_to_ptr.vmem [resolvable:$true] %s17
      %20 = dma.hbm_to_vmem [thread:$0]  %s0, 128, %s18, [#allocation3]
    $region5: #{gradual_style_block_forward.1} parent=1 // pred_fallthru
      _
    // Predicated region
    $region6: #{gradual_style_block_forward.1} parent=1 // pred_check
      _
    $region7: #{gradual_style_block_forward.1} parent=1 // pred_check_branch
      %22 = sbr.rel (0) target = $region9
    $region8: #{gradual_style_block_forward.1} parent=1 // pred_region
      %s24 = ssub.s32 2048, 2048
      %25 = vsyncadd [#allocation6], %s24
      %s26 = sshll.u32 [#allocation5], 4
      %s27 = int_to_ptr.vmem [resolvable:$true] %s26
      %32 = dma.hbm_to_vmem [thread:$0]  %s1, 2048, %s27, [#allocation6], 128, 128, 8
    $region9: #{gradual_style_block_forward.1} parent=1 // pred_fallthru
      _
    // Predicated region
    $region10: #{gradual_style_block_forward.1} parent=1 // pred_check
      _
    $region11: #{gradual_style_block_forward.1} parent=1 // pred_check_branch
      %34 = sbr.rel (0) target = $region13
    $region12: #{gradual_style_block_forward.1} parent=1 // pred_region
      %s36 = ssub.s32 16, 16
      %37 = vsyncadd [#allocation6], %s36
      %s39 = sshll.u32 [#allocation7], 4
      %s40 = int_to_ptr.vmem [resolvable:$true] %s39
      %42 = dma.hbm_to_vmem [thread:$0]  %s2, 16, %s40, [#allocation6]
    $region13: #{gradual_style_block_forward.1} parent=1 // pred_fallthru
      _
    // Predicated region
    $region14: #{gradual_style_block_forward.1} parent=1 // pred_check
      _
    $region15: #{gradual_style_block_forward.1} parent=1 // pred_check_branch
      %44 = sbr.rel (0) target = $region17
    $region16: #{gradual_style_block_forward.1} parent=1 // pred_region
      %45 = dma.done [#allocation3], 128
    $region17: #{gradual_style_block_forward.1} parent=1 // pred_fallthru
      _
    // Predicated region
    $region18: #{gradual_style_block_forward.1} parent=1 // pred_check
      _
    $region19: #{gradual_style_block_forward.1} parent=1 // pred_check_branch
      %47 = sbr.rel (0) target = $region21
    $region20: #{gradual_style_block_forward.1} parent=1 // pred_region
      %48 = dma.done [#allocation6], 2048
    $region21: #{gradual_style_block_forward.1} parent=1 // pred_fallthru
      _
    // Predicated region
    $region22: #{gradual_style_block_forward.1} parent=1 // pred_check
      _
    $region23: #{gradual_style_block_forward.1} parent=1 // pred_check_branch
      %50 = sbr.rel (0) target = $region25
    $region24: #{gradual_style_block_forward.1} parent=1 // pred_region
      %51 = dma.done [#allocation6], 16
    $region25: #{gradual_style_block_forward.1} parent=1 // pred_fallthru
      _
    %v52 = vld [vmem:[#allocation2] sm:$0xff]
    %v53 = vld [vmem:[#allocation5] sm:$0xff]
    %v54 = vld [vmem:[#allocation5 + $0x8] sm:$0xff]
    %v55 = vld [vmem:[#allocation5 + $0x10] sm:$0xff]
    %v56 = vld [vmem:[#allocation5 + $0x18] sm:$0xff]
    %v57 = vld [vmem:[#allocation5 + $0x20] sm:$0xff]
    %v58 = vld [vmem:[#allocation5 + $0x28] sm:$0xff]
    %v59 = vld [vmem:[#allocation5 + $0x30] sm:$0xff]
    %v60 = vld [vmem:[#allocation5 + $0x38] sm:$0xff]
    %v61 = vld [vmem:[#allocation5 + $0x40] sm:$0xff]
    %v62 = vld [vmem:[#allocation5 + $0x48] sm:$0xff]
    %v63 = vld [vmem:[#allocation5 + $0x50] sm:$0xff]
    %v64 = vld [vmem:[#allocation5 + $0x58] sm:$0xff]
    %v65 = vld [vmem:[#allocation5 + $0x60] sm:$0xff]
    %v66 = vld [vmem:[#allocation5 + $0x68] sm:$0xff]
    %v67 = vld [vmem:[#allocation5 + $0x70] sm:$0xff]
    %v68 = vld [vmem:[#allocation5 + $0x78] sm:$0xff]
    %v69 = vld [vmem:[#allocation7] sm:$0x1]
    %v71 = vlaneseq
    %v72 = vshrl.u32 %v71, 7
    %v73 = vsub.s32 0, %v72
    %v74 = vrot.slane %v69, %v73
    %76 = vmatprep.subr.mxu0 0.0
    %77 = vmatpush1.msra.mxu0 %v68
    %78 = vmatprep.subr.mxu0 0.0
    %79 = vmatpush1.msra.mxu0 %v67
    %80 = vmatprep.subr.mxu0 0.0
    %81 = vmatpush1.msra.mxu0 %v66
    %82 = vmatprep.subr.mxu0 0.0
    %83 = vmatpush1.msra.mxu0 %v65
    %84 = vmatprep.subr.mxu0 0.0
    %85 = vmatpush1.msra.mxu0 %v64
    %86 = vmatprep.subr.mxu0 0.0
    %87 = vmatpush1.msra.mxu0 %v63
    %88 = vmatprep.subr.mxu0 0.0
    %89 = vmatpush1.msra.mxu0 %v62
    %90 = vmatprep.subr.mxu0 0.0
    %91 = vmatpush1.msra.mxu0 %v61
    %92 = vmatprep.subr.mxu0 0.0
    %93 = vmatpush1.msra.mxu0 %v60
    %94 = vmatprep.subr.mxu0 0.0
    %95 = vmatpush1.msra.mxu0 %v59
    %96 = vmatprep.subr.mxu0 0.0
    %97 = vmatpush1.msra.mxu0 %v58
    %98 = vmatprep.subr.mxu0 0.0
    %99 = vmatpush1.msra.mxu0 %v57
    %100 = vmatprep.subr.mxu0 0.0
    %101 = vmatpush1.msra.mxu0 %v56
    %102 = vmatprep.subr.mxu0 0.0
    %103 = vmatpush1.msra.mxu0 %v55
    %104 = vmatprep.subr.mxu0 0.0
    %105 = vmatpush1.msra.mxu0 %v54
    %106 = vmatprep.subr.mxu0 0.0
    %107 = vmatpush1.msra.mxu0 %v53
    %108 = vmatprep.subr.mxu0 0.0
    %109 = vmatpush2.msra.mxu0 0.0
    %110 = vmatprep.subr.mxu0 0.0
    %111 = vmatpush2.msra.mxu0 0.0
    %112 = vmatprep.subr.mxu0 0.0
    %113 = vmatpush2.msra.mxu0 0.0
    %114 = vmatprep.subr.mxu0 0.0
    %115 = vmatpush2.msra.mxu0 0.0
    %116 = vmatprep.subr.mxu0 0.0
    %117 = vmatpush2.msra.mxu0 0.0
    %118 = vmatprep.subr.mxu0 0.0
    %119 = vmatpush2.msra.mxu0 0.0
    %120 = vmatprep.subr.mxu0 0.0
    %121 = vmatpush2.msra.mxu0 0.0
    %122 = vmatprep.subr.mxu0 0.0
    %123 = vmatpush2.msra.mxu0 0.0
    %124 = vmatprep.subr.mxu0 0.0
    %125 = vmatpush2.msra.mxu0 0.0
    %126 = vmatprep.subr.mxu0 0.0
    %127 = vmatpush2.msra.mxu0 0.0
    %128 = vmatprep.subr.mxu0 0.0
    %129 = vmatpush2.msra.mxu0 0.0
    %130 = vmatprep.subr.mxu0 0.0
    %131 = vmatpush2.msra.mxu0 0.0
    %132 = vmatprep.subr.mxu0 0.0
    %133 = vmatpush2.msra.mxu0 0.0
    %134 = vmatprep.subr.mxu0 0.0
    %135 = vmatpush2.msra.mxu0 0.0
    %136 = vmatprep.subr.mxu0 0.0
    %137 = vmatpush2.msra.mxu0 0.0
    %138 = vmatprep.subr.mxu0 0.0
    %139 = vmatpush2.msra.mxu0 0.0
    %140 = vmatprep.mubr.f32.mxu0 0.0
    %141 = vmatmul.mubr.f32.gmra.mxu0 %v52
    %v142 = vpop.f32.mrf.mxu0
    %v143 = vadd.f32 %v74, %v142
    %v144 = vpop.f32.mrf.mxu0
    %145 = vdwg.mxu0
    %146 = vst [vmem:[#allocation8] sm:$0xff] %v143
    // Predicated region
    $region26: #{gradual_style_block_forward.1} parent=1 // pred_check
      _
    $region27: #{gradual_style_block_forward.1} parent=1 // pred_check_branch
      %148 = sbr.rel (0) target = $region29
    $region28: #{gradual_style_block_forward.1} parent=1 // pred_region
      %s150 = ssub.s32 128, 128
      %151 = vsyncadd [#allocation4], %s150
      %s153 = sshll.u32 [#allocation8], 4
      %s154 = int_to_ptr.vmem [resolvable:$true] %s153
      %156 = dma.vmem_to_hbm [thread:$0]  %s154, 128, %s3, [#allocation4]
    $region29: #{gradual_style_block_forward.1} parent=1 // pred_fallthru
      _
    // Predicated region
    $region30: #{gradual_style_block_forward.1} parent=1 // pred_check
      _
    $region31: #{gradual_style_block_forward.1} parent=1 // pred_check_branch
      %158 = sbr.rel (0) target = $region33
    $region32: #{gradual_style_block_forward.1} parent=1 // pred_region
      %159 = dma.done [#allocation4], 128
    $region33: #{gradual_style_block_forward.1} parent=1 // pred_fallthru
      _
    %160 = vsyncpa [#allocation3], 1
    %161 = vsyncpa [#allocation6], 1
    %162 = vsyncpa [#allocation4], 1

</llo_original>
